<compile_context>
chip_gen: v7x
topology: tpu7x:2x2x1
jax: 0.10.0
libtpu: 0.0.40
codegen_flags: <defaults>
</compile_context>

<pallas_src>
import jax
import jax.numpy as jnp
from jax.experimental import pallas as pl
from jax.experimental.pallas import tpu as pltpu

BN_EPS = 1e-5   # PyTorch BatchNorm1d default eps
LANES = 128


def _round_up(x, m):
    return (x + m - 1) // m * m


def build_gnn(n_feats, h1, h2, n_classes=2):
    """Returns (pack_params, forward) for a 2-layer GCN + Linear head + softmax."""
    assert 2 * h1 <= LANES and 2 * h2 <= LANES and n_classes <= LANES
    # Keep weight blocks sublane-aligned inside the slabs.
    assert n_feats % 8 == 0 and h1 % 8 == 0 and h2 % 8 == 0

    # Static row offsets inside the bf16 weight slab (16-row aligned: bf16
    # sublanes pack in pairs, so slices start on packed-tile boundaries).
    r_w1 = 0                                  # [W1 | Wres1]   (n_feats, 2*h1)
    r_w2 = _round_up(r_w1 + n_feats, 16)      # [W2 | Wres2]   (h1, 2*h2)
    r_wd = _round_up(r_w2 + h1, 16)           # diag(s2)@Wd    (h2, LANES)
    w_rows = _round_up(r_wd + h2, 16)

    # f32 vector slab rows: 0:b1 1:br1 2:s1 3:t1 4:b2 5:br2 6:bd_folded
    V_ROWS = 8

    def pack_params(w1, b1, wr1, br1, g1, bt1, m1, v1,
                    w2, b2, wr2, br2, g2, bt2, m2, v2,
                    wd, bd):
        # Fold BatchNorm1d eval (running stats + affine) into scale/shift:
        #   bn(x) = x * s + t,   s = gamma / sqrt(var+eps),  t = beta - mean*s
        s1 = g1 / jnp.sqrt(v1 + BN_EPS); t1 = bt1 - m1 * s1
        s2 = g2 / jnp.sqrt(v2 + BN_EPS); t2 = bt2 - m2 * s2
        # BN2 folded exactly into the head: logits = z2 @ (diag(s2)Wd) + (t2 Wd + bd)
        wd_f = wd * s2[:, None]
        bd_f = t2 @ wd + bd

        w_slab = jnp.zeros((w_rows, LANES), jnp.float32)
        w_slab = w_slab.at[r_w1:r_w1 + n_feats, :2 * h1].set(
            jnp.concatenate([w1, wr1], axis=1))
        w_slab = w_slab.at[r_w2:r_w2 + h1, :2 * h2].set(
            jnp.concatenate([w2, wr2], axis=1))
        w_slab = w_slab.at[r_wd:r_wd + h2, :n_classes].set(wd_f)
        w_slab = w_slab.astype(jnp.bfloat16)      # quantize host-side, not per-step

        v_slab = jnp.zeros((V_ROWS, LANES), jnp.float32)
        for i, vec in enumerate((b1, br1, s1, t1)):
            v_slab = v_slab.at[i, :h1].set(vec)
        for i, vec in enumerate((b2, br2)):
            v_slab = v_slab.at[4 + i, :h2].set(vec)
        # Head bias: pad lanes get a large negative so the padded softmax
        # columns underflow to exactly 0 (output stays lane-dense in-kernel).
        bd_row = jnp.full((LANES,), -1e30, jnp.float32).at[:n_classes].set(bd_f)
        v_slab = v_slab.at[6, :].set(bd_row)
        return w_slab, v_slab

    def forward(a_norm, x, w_slab, v_slab):
        """a_norm: (B, N, N) bf16 normalized dense adjacency; x: (B, N, F) bf16."""
        assert a_norm.dtype == jnp.bfloat16 and x.dtype == jnp.bfloat16
        bsz, n, _ = a_norm.shape
        assert x.shape == (bsz, n, n_feats)

        # Graphs per grid step: target Bt*N >= 256 rows to fill the MXU, but
        # keep >= 2 "parallel" steps when possible so v7x's 2 TensorCores both
        # get work. Bt must divide B (shrink to a divisor).
        bt = min(bsz, max(1, -(-256 // n)))
        if bsz > 1 and bsz // bt < 2:
            bt = max(1, bsz // 2)
        while bsz % bt:
            bt -= 1
        m = bt * n

        def kernel(a_ref, x_ref, w_ref, v_ref, out_ref):
            a = a_ref[...]                               # (bt, n, n) bf16
            h0 = x_ref[...].reshape(m, n_feats)          # (bt*n, F) bf16

            def gcn_layer(h_bf16, r_w, f_in, hdim, v_row):
                # Fused projection: one MXU push produces [h@W | h@Wres].
                wcat = w_ref[r_w:r_w + f_in, :2 * hdim]              # bf16
                y = jnp.dot(h_bf16, wcat,
                            preferred_element_type=jnp.float32)      # (m, 2H) f32
                hw, res_pre = y[:, :hdim], y[:, hdim:2 * hdim]
                # Aggregation is the only per-graph op: batched MXU matmul.
                agg = jnp.einsum(
                    'bij,bjk->bik', a,
                    hw.astype(jnp.bfloat16).reshape(bt, n, hdim),
                    preferred_element_type=jnp.float32).reshape(m, hdim)
                b = v_ref[v_row:v_row + 1, :hdim]
                br = v_ref[v_row + 1:v_row + 2, :hdim]
                conv = jnp.maximum(agg + b, 0.0)          # GraphConv + relu
                res = jnp.maximum(res_pre + br, 0.0)      # residual Linear + relu
                # Dropout(p=0.5) is identity in eval; BN handled by caller.
                return conv + res

            z1 = gcn_layer(h0, r_w1, n_feats, h1, 0)
            # BN1 eval epilogue (exact): its shift is not weight-space foldable
            # through layer-2's aggregation, so keep one fused multiply-add.
            hmid = z1 * v_ref[2:3, :h1] + v_ref[3:4, :h1]

            z2 = gcn_layer(hmid.astype(jnp.bfloat16), r_w2, h1, h2, 4)
            # BN2 was folded host-side into Wd/bd -> no epilogue here.

            # dense1 + softmax; output kept 128-lane dense (pad cols -> 0).
            wd = w_ref[r_wd:r_wd + h2, :]                 # (h2, 128) bf16
            bd = v_ref[6:7, :]                            # (1, 128) f32
            logits = jnp.dot(z2.astype(jnp.bfloat16), wd,
                             preferred_element_type=jnp.float32) + bd
            mx = jnp.max(logits, axis=-1, keepdims=True)
            e = jnp.exp(logits - mx)
            denom = jnp.sum(e, axis=-1, keepdims=True)
            out_ref[...] = (e * pl.reciprocal(denom, approx=True)
                            ).reshape(bt, n, LANES)

        out = pl.pallas_call(
            kernel,
            out_shape=jax.ShapeDtypeStruct((bsz, n, LANES), jnp.float32),
            grid_spec=pltpu.PrefetchScalarGridSpec(
                num_scalar_prefetch=0,
                grid=(bsz // bt,),
                in_specs=[
                    pl.BlockSpec((bt, n, n), lambda s: (s, 0, 0)),
                    pl.BlockSpec((bt, n, n_feats), lambda s: (s, 0, 0)),
                    # Constant block index -> fetched once, stays VMEM-resident.
                    pl.BlockSpec((w_rows, LANES), lambda s: (0, 0)),
                    pl.BlockSpec((V_ROWS, LANES), lambda s: (0, 0)),
                ],
                out_specs=pl.BlockSpec((bt, n, LANES), lambda s: (s, 0, 0)),
            ),
            compiler_params=pltpu.CompilerParams(
                dimension_semantics=("parallel",)),
        )(a_norm, x, w_slab, v_slab)
        return out[:, :, :n_classes]   # drop lane padding outside the kernel

    return pack_params, forward


def gcn_reference(a, x, params):
    """Pure-JAX f32 reference of the same eval-mode forward pass."""
    (w1, b1, wr1, br1, g1, bt1, m1, v1,
     w2, b2, wr2, br2, g2, bt2, m2, v2, wd, bd) = params

    def layer(h, w, b, wr, br, g, bt, mean, var):
        conv = jnp.maximum(jnp.einsum('bij,bjk->bik', a, h @ w) + b, 0.0)
        res = jnp.maximum(h @ wr + br, 0.0)
        z = conv + res                                   # dropout identity (eval)
        return (z - mean) / jnp.sqrt(var + BN_EPS) * g + bt

    h = layer(x, w1, b1, wr1, br1, g1, bt1, m1, v1)
    h = layer(h, w2, b2, wr2, br2, g2, bt2, m2, v2)
    return jax.nn.softmax(h @ wd + bd, axis=-1)


if __name__ == "__main__":
    key = jax.random.PRNGKey(0)
    B, N, F, H1, H2 = 4, 8, 32, 16, 16   # 4 small graphs, n_feats=32, layers=[16,16]
    keys = jax.random.split(key, 16)

    # Batched random symmetric adjacency with self loops, then D^-1/2 A D^-1/2.
    u = jax.random.uniform(keys[0], (B, N, N))
    adj = ((u + jnp.swapaxes(u, 1, 2)) > 1.0).astype(jnp.float32)
    adj = jnp.minimum(adj + jnp.eye(N, dtype=jnp.float32)[None], 1.0)
    dinv = 1.0 / jnp.sqrt(jnp.sum(adj, axis=2))
    a_norm = adj * dinv[:, :, None] * dinv[:, None, :]

    x = jax.random.normal(keys[1], (B, N, F), jnp.float32)

    def lin(k, fi, fo, scale=0.1):
        kw, kb = jax.random.split(k)
        return (jax.random.normal(kw, (fi, fo), jnp.float32) * scale,
                jax.random.normal(kb, (fo,), jnp.float32) * scale)

    # Layer 1: GraphConv W/b, residual Linear, BatchNorm with nontrivial stats.
    w1, b1 = lin(keys[2], F, H1)
    wr1, br1 = lin(keys[3], F, H1)
    g1 = jax.random.uniform(keys[4], (H1,), minval=0.5, maxval=1.5)
    bt1 = jax.random.normal(keys[5], (H1,)) * 0.1
    m1 = jax.random.normal(keys[6], (H1,)) * 0.1
    v1 = jax.random.uniform(keys[7], (H1,), minval=0.5, maxval=1.5)
    # Layer 2.
    w2, b2 = lin(keys[8], H1, H2)
    wr2, br2 = lin(keys[9], H1, H2)
    g2 = jax.random.uniform(keys[10], (H2,), minval=0.5, maxval=1.5)
    bt2 = jax.random.normal(keys[11], (H2,)) * 0.1
    m2 = jax.random.normal(keys[12], (H2,)) * 0.1
    v2 = jax.random.uniform(keys[13], (H2,), minval=0.5, maxval=1.5)
    # Head: Linear(layers[-1], 2).
    wd, bd = lin(keys[14], H2, 2)

    params = (w1, b1, wr1, br1, g1, bt1, m1, v1,
              w2, b2, wr2, br2, g2, bt2, m2, v2, wd, bd)

    pack_params, forward = build_gnn(n_feats=F, h1=H1, h2=H2, n_classes=2)
    w_slab, v_slab = pack_params(*params)

    # bf16 casts done once, host-side (halves A/X DMA, no per-step VPU casts).
    a_bf = a_norm.astype(jnp.bfloat16)
    x_bf = x.astype(jnp.bfloat16)

    out = jax.block_until_ready(forward(a_bf, x_bf, w_slab, v_slab))
    ref = gcn_reference(a_norm, x, params)

    assert out.shape == (B, N, 2)
    assert bool(jnp.all(jnp.isfinite(out)))
    # Rows sum to ~1 (looser tol: approx reciprocal + bf16 matmul inputs).
    assert bool(jnp.allclose(jnp.sum(out, axis=-1), 1.0, atol=1e-2))
    assert bool(jnp.allclose(out, ref, atol=3e-2)), float(jnp.max(jnp.abs(out - ref)))
    print("KERNEL_OK")
</pallas_src>

<mosaic_0001>
module attributes {stable_mosaic.version = 11 : i64} {
  func.func @kernel(%arg0: i32, %arg1: memref<2x8x8xbf16, #tpu.memory_space<vmem>>, %arg2: memref<2x8x32xbf16, #tpu.memory_space<vmem>>, %arg3: memref<64x128xbf16, #tpu.memory_space<vmem>>, %arg4: memref<8x128xf32, #tpu.memory_space<vmem>>, %arg5: memref<2x8x128xf32, #tpu.memory_space<vmem>>) attributes {dimension_semantics = [#tpu.dimension_semantics<parallel>], iteration_bounds = array<i64: 2>, scalar_prefetch = 0 : i64, scratch_operands = 0 : i64, tpu.core_type = #tpu.core_type<tc>, window_params = [{transform_indices = @transform_0, window_bounds = array<i64: 2, 8, 8>}, {transform_indices = @transform_1, window_bounds = array<i64: 2, 8, 32>}, {pipeline_mode = #tpu.pipeline_mode<synchronous>, transform_indices = @transform_2, window_bounds = array<i64: 64, 128>}, {pipeline_mode = #tpu.pipeline_mode<synchronous>, transform_indices = @transform_3, window_bounds = array<i64: 8, 128>}, {transform_indices = @transform_4, window_bounds = array<i64: 2, 8, 128>}]} {
    %c0 = arith.constant 0 : index
    %c0_0 = arith.constant 0 : index
    %c0_1 = arith.constant 0 : index
    %0 = vector.load %arg1[%c0, %c0_0, %c0_1] : memref<2x8x8xbf16, #tpu.memory_space<vmem>>, vector<2x8x8xbf16>
    %c0_2 = arith.constant 0 : index
    %c0_3 = arith.constant 0 : index
    %c0_4 = arith.constant 0 : index
    %1 = vector.load %arg2[%c0_2, %c0_3, %c0_4] : memref<2x8x32xbf16, #tpu.memory_space<vmem>>, vector<2x8x32xbf16>
    %2 = vector.shape_cast %1 : vector<2x8x32xbf16> to vector<16x32xbf16>
    %c0_5 = arith.constant 0 : index
    %c0_6 = arith.constant 0 : index
    %3 = vector.load %arg3[%c0_5, %c0_6] : memref<64x128xbf16, #tpu.memory_space<vmem>>, vector<32x32xbf16>
    %cst = arith.constant dense<0.000000e+00> : vector<16x32xf32>
    %4 = tpu.matmul %2, %3, %cst {dimension_numbers = #tpu.dot_dimension_numbers<[1], [0], [0], [1], [0, 0, 1, 1], [], []>} : vector<16x32xbf16>, vector<32x32xbf16>, vector<16x32xf32> -> vector<16x32xf32>
    %5 = vector.extract_strided_slice %4 {offsets = [0, 0], sizes = [16, 16], strides = [1, 1]} : vector<16x32xf32> to vector<16x16xf32>
    %6 = vector.extract_strided_slice %4 {offsets = [0, 16], sizes = [16, 16], strides = [1, 1]} : vector<16x32xf32> to vector<16x16xf32>
    %7 = arith.truncf %5 : vector<16x16xf32> to vector<16x16xbf16>
    %8 = vector.shape_cast %7 : vector<16x16xbf16> to vector<2x8x16xbf16>
    "tpu.trace_start"() <{level = 10 : i32, message = "bij,bjk->bik"}> : () -> ()
    %cst_7 = arith.constant dense<0.000000e+00> : vector<2x8x16xf32>
    %9 = tpu.matmul %0, %8, %cst_7 {dimension_numbers = #tpu.dot_dimension_numbers<[2], [1], [1], [2], [0, 0, 0, 1, 1, 2], [0], [0]>} : vector<2x8x8xbf16>, vector<2x8x16xbf16>, vector<2x8x16xf32> -> vector<2x8x16xf32>
    "tpu.trace_stop"() : () -> ()
    %10 = vector.shape_cast %9 : vector<2x8x16xf32> to vector<16x16xf32>
    %c0_8 = arith.constant 0 : index
    %c0_9 = arith.constant 0 : index
    %11 = vector.load %arg4[%c0_8, %c0_9] : memref<8x128xf32, #tpu.memory_space<vmem>>, vector<1x16xf32>
    %c1 = arith.constant 1 : index
    %c0_10 = arith.constant 0 : index
    %12 = vector.load %arg4[%c1, %c0_10] : memref<8x128xf32, #tpu.memory_space<vmem>>, vector<1x16xf32>
    %13 = vector.broadcast %11 : vector<1x16xf32> to vector<16x16xf32>
    %14 = arith.addf %10, %13 : vector<16x16xf32>
    %cst_11 = arith.constant 0.000000e+00 : f32
    %15 = vector.broadcast %cst_11 : f32 to vector<16x16xf32>
    %16 = arith.maximumf %14, %15 : vector<16x16xf32>
    %17 = vector.broadcast %12 : vector<1x16xf32> to vector<16x16xf32>
    %18 = arith.addf %6, %17 : vector<16x16xf32>
    %cst_12 = arith.constant 0.000000e+00 : f32
    %19 = vector.broadcast %cst_12 : f32 to vector<16x16xf32>
    %20 = arith.maximumf %18, %19 : vector<16x16xf32>
    %21 = arith.addf %16, %20 : vector<16x16xf32>
    %c2 = arith.constant 2 : index
    %c0_13 = arith.constant 0 : index
    %22 = vector.load %arg4[%c2, %c0_13] : memref<8x128xf32, #tpu.memory_space<vmem>>, vector<1x16xf32>
    %23 = vector.broadcast %22 : vector<1x16xf32> to vector<16x16xf32>
    %24 = arith.mulf %21, %23 : vector<16x16xf32>
    %c3 = arith.constant 3 : index
    %c0_14 = arith.constant 0 : index
    %25 = vector.load %arg4[%c3, %c0_14] : memref<8x128xf32, #tpu.memory_space<vmem>>, vector<1x16xf32>
    %26 = vector.broadcast %25 : vector<1x16xf32> to vector<16x16xf32>
    %27 = arith.addf %24, %26 : vector<16x16xf32>
    %28 = arith.truncf %27 : vector<16x16xf32> to vector<16x16xbf16>
    %c32 = arith.constant 32 : index
    %c0_15 = arith.constant 0 : index
    %29 = vector.load %arg3[%c32, %c0_15] : memref<64x128xbf16, #tpu.memory_space<vmem>>, vector<16x32xbf16>
    %cst_16 = arith.constant dense<0.000000e+00> : vector<16x32xf32>
    %30 = tpu.matmul %28, %29, %cst_16 {dimension_numbers = #tpu.dot_dimension_numbers<[1], [0], [0], [1], [0, 0, 1, 1], [], []>} : vector<16x16xbf16>, vector<16x32xbf16>, vector<16x32xf32> -> vector<16x32xf32>
    %31 = vector.extract_strided_slice %30 {offsets = [0, 0], sizes = [16, 16], strides = [1, 1]} : vector<16x32xf32> to vector<16x16xf32>
    %32 = vector.extract_strided_slice %30 {offsets = [0, 16], sizes = [16, 16], strides = [1, 1]} : vector<16x32xf32> to vector<16x16xf32>
    %33 = arith.truncf %31 : vector<16x16xf32> to vector<16x16xbf16>
    %34 = vector.shape_cast %33 : vector<16x16xbf16> to vector<2x8x16xbf16>
    "tpu.trace_start"() <{level = 10 : i32, message = "bij,bjk->bik"}> : () -> ()
    %cst_17 = arith.constant dense<0.000000e+00> : vector<2x8x16xf32>
    %35 = tpu.matmul %0, %34, %cst_17 {dimension_numbers = #tpu.dot_dimension_numbers<[2], [1], [1], [2], [0, 0, 0, 1, 1, 2], [0], [0]>} : vector<2x8x8xbf16>, vector<2x8x16xbf16>, vector<2x8x16xf32> -> vector<2x8x16xf32>
    "tpu.trace_stop"() : () -> ()
    %36 = vector.shape_cast %35 : vector<2x8x16xf32> to vector<16x16xf32>
    %c4 = arith.constant 4 : index
    %c0_18 = arith.constant 0 : index
    %37 = vector.load %arg4[%c4, %c0_18] : memref<8x128xf32, #tpu.memory_space<vmem>>, vector<1x16xf32>
    %c5 = arith.constant 5 : index
    %c0_19 = arith.constant 0 : index
    %38 = vector.load %arg4[%c5, %c0_19] : memref<8x128xf32, #tpu.memory_space<vmem>>, vector<1x16xf32>
    %39 = vector.broadcast %37 : vector<1x16xf32> to vector<16x16xf32>
    %40 = arith.addf %36, %39 : vector<16x16xf32>
    %cst_20 = arith.constant 0.000000e+00 : f32
    %41 = vector.broadcast %cst_20 : f32 to vector<16x16xf32>
    %42 = arith.maximumf %40, %41 : vector<16x16xf32>
    %43 = vector.broadcast %38 : vector<1x16xf32> to vector<16x16xf32>
    %44 = arith.addf %32, %43 : vector<16x16xf32>
    %cst_21 = arith.constant 0.000000e+00 : f32
    %45 = vector.broadcast %cst_21 : f32 to vector<16x16xf32>
    %46 = arith.maximumf %44, %45 : vector<16x16xf32>
    %47 = arith.addf %42, %46 : vector<16x16xf32>
    %c48 = arith.constant 48 : index
    %c0_22 = arith.constant 0 : index
    %48 = vector.load %arg3[%c48, %c0_22] : memref<64x128xbf16, #tpu.memory_space<vmem>>, vector<16x128xbf16>
    %c6 = arith.constant 6 : index
    %c0_23 = arith.constant 0 : index
    %49 = vector.load %arg4[%c6, %c0_23] : memref<8x128xf32, #tpu.memory_space<vmem>>, vector<1x128xf32>
    %50 = arith.truncf %47 : vector<16x16xf32> to vector<16x16xbf16>
    %cst_24 = arith.constant dense<0.000000e+00> : vector<16x128xf32>
    %51 = tpu.matmul %50, %48, %cst_24 {dimension_numbers = #tpu.dot_dimension_numbers<[1], [0], [0], [1], [0, 0, 1, 1], [], []>} : vector<16x16xbf16>, vector<16x128xbf16>, vector<16x128xf32> -> vector<16x128xf32>
    %52 = vector.broadcast %49 : vector<1x128xf32> to vector<16x128xf32>
    %53 = arith.addf %51, %52 : vector<16x128xf32>
    %cst_25 = arith.constant dense<0xFF800000> : vector<16xf32>
    %54 = vector.multi_reduction <maximumf>, %53, %cst_25 [1] : vector<16x128xf32> to vector<16xf32>
    %55 = vector.shape_cast %54 : vector<16xf32> to vector<16x1xf32>
    %56 = vector.broadcast %55 : vector<16x1xf32> to vector<16x128xf32>
    %57 = arith.subf %53, %56 : vector<16x128xf32>
    %58 = math.exp %57 : vector<16x128xf32>
    %cst_26 = arith.constant dense<0.000000e+00> : vector<16xf32>
    %59 = vector.multi_reduction <add>, %58, %cst_26 [1] : vector<16x128xf32> to vector<16xf32>
    %60 = vector.shape_cast %59 : vector<16xf32> to vector<16x1xf32>
    %61 = tpu.reciprocal %60 {approx = true} : vector<16x1xf32> -> vector<16x1xf32>
    %62 = vector.broadcast %61 : vector<16x1xf32> to vector<16x128xf32>
    %63 = arith.mulf %58, %62 : vector<16x128xf32>
    %64 = vector.shape_cast %63 : vector<16x128xf32> to vector<2x8x128xf32>
    %c0_27 = arith.constant 0 : index
    %c0_28 = arith.constant 0 : index
    %c0_29 = arith.constant 0 : index
    %65 = vector.load %arg5[%c0_27, %c0_28, %c0_29] : memref<2x8x128xf32, #tpu.memory_space<vmem>>, vector<2x8x128xf32>
    tpu.vector_store %arg5[%c0_27, %c0_28, %c0_29], %64 {strides = array<i32>} : memref<2x8x128xf32, #tpu.memory_space<vmem>>, vector<2x8x128xf32>,
    return
  }
  func.func @transform_0(%arg0: i32) -> (i32, i32, i32) {
    %c0_i32 = arith.constant 0 : i32
    %c0_i32_0 = arith.constant 0 : i32
    %c0_i32_1 = arith.constant 0 : i32
    return %arg0, %c0_i32, %c0_i32_0 : i32, i32, i32
  }
  func.func @transform_1(%arg0: i32) -> (i32, i32, i32) {
    %c0_i32 = arith.constant 0 : i32
    %c0_i32_0 = arith.constant 0 : i32
    %c0_i32_1 = arith.constant 0 : i32
    return %arg0, %c0_i32, %c0_i32_0 : i32, i32, i32
  }
  func.func @transform_2(%arg0: i32) -> (i32, i32) {
    %c0_i32 = arith.constant 0 : i32
    %c0_i32_0 = arith.constant 0 : i32
    %c0_i32_1 = arith.constant 0 : i32
    return %c0_i32, %c0_i32_0 : i32, i32
  }
  func.func @transform_3(%arg0: i32) -> (i32, i32) {
    %c0_i32 = arith.constant 0 : i32
    %c0_i32_0 = arith.constant 0 : i32
    %c0_i32_1 = arith.constant 0 : i32
    return %c0_i32, %c0_i32_0 : i32, i32
  }
  func.func @transform_4(%arg0: i32) -> (i32, i32, i32) {
    %c0_i32 = arith.constant 0 : i32
    %c0_i32_0 = arith.constant 0 : i32
    %c0_i32_1 = arith.constant 0 : i32
    return %arg0, %c0_i32, %c0_i32_0 : i32, i32, i32
  }
}

</mosaic_0001>

<llo_original>
// kernel: tpu_custom_call.1
$region0: #{tpu_custom_call.1}
  #allocation0 [shape = 'u32[]', space=smem, size = 0x4, offset = 0x4, fixed_abs, tag = 'smem constant byte address 0x4 - core index']
  #allocation1 [shape = 'u32[144,128]{1,0:T(1,128)}', space=vmem, size = 0x12000, scoped, tag = 'internal scratch']
  %s0 = inlined_call_operand.hbm [shape: bf16[4,8,8], index: 0, kind: input, shape index: {}]
  %s1 = inlined_call_operand.hbm [shape: bf16[4,8,32], index: 1, kind: input, shape index: {}]
  %s2 = inlined_call_operand.hbm [shape: bf16[64,128], index: 2, kind: input, shape index: {}]
  %s3 = inlined_call_operand.vmem [shape: f32[8,128], index: 3, kind: input, shape index: {}]
  %s4 = inlined_call_operand.hbm [shape: f32[4,8,128], index: 4, kind: output, shape index: {}]
  %s5 = sld [smem:[#allocation0]]
  $region61: #{tpu_custom_call.1} parent=0
    _
  %s7 = ssub.s32 1, %s5
  %s8 = scalar_select 0, %s7, %s5
  $region1: #{tpu_custom_call.1} parent=0
    #allocation2 [shape = 'u8[8192]{0}', space=vmem, size = 0x2000, scoped, tag = 'input window, operand 0']
    #allocation3 [shape = 's32[2]{0}', space=sflag, size = 0x8, scoped, tag = 'scoped memory for tpu_custom_call.1']
    #allocation4 [shape = 's32[2]{0}', space=sflag, size = 0x8, scoped, tag = 'scoped memory for tpu_custom_call.1']
    #allocation5 [shape = 'u8[8192]{0}', space=vmem, size = 0x2000, scoped, tag = 'input window, operand 1']
    #allocation6 [shape = 's32[2]{0}', space=sflag, size = 0x8, scoped, tag = 'scoped memory for tpu_custom_call.1']
    #allocation7 [shape = 'u8[16384]{0}', space=vmem, size = 0x4000, scoped, tag = 'input window, operand 2, single buffered']
    #allocation8 [shape = 'u8[16384]{0}', space=vmem, size = 0x4000, scoped, tag = 'output window, operand 0']
    %9 = vsyncpa [#allocation3], 0
    %s10 = scalar_lea.sflag [#allocation3], 1
    %11 = vsyncpa %s10, 0
    %12 = vsyncpa [#allocation6], 0
    %s13 = scalar_lea.sflag [#allocation6], 1
    %14 = vsyncpa %s13, 0
    %15 = vsyncpa [#allocation4], 0
    %s16 = scalar_lea.sflag [#allocation4], 1
    %17 = vsyncpa %s16, 0
    loop: start=0, step=1, limit=4
    $region2: #{tpu_custom_call.1} parent=1 // loop_pre_header
      _
    $region3: #{tpu_custom_call.1} parent=1 // loop_header
      %s19 = sphi 0, %s23
      %p20 = scmp.ge.s32.totalorder %s19, 4
      %s29 = sphi 0, %s31
      %s32 = sphi 0, %s29
      %s33 = sphi 0, %s32
      %s49 = sphi 0, %s33
      %s55 = sphi 0, %s57
      %s58 = sphi 0, %s55
      %s59 = sphi 0, %s58
      %s75 = sphi 0, %s59
      %s79 = sphi 0, %s79
      %s81 = sphi 0, %s79
      %s82 = sphi 0, %s81
      %s96 = sphi 0, %s82
      %s100 = sphi 0, %s100
      %s102 = sphi 0, %s100
      %s103 = sphi 0, %s102
      %s117 = sphi 0, %s103
      %s123 = sphi 0, %s125
      %s126 = sphi 0, %s123
      %s127 = sphi 0, %s126
      %s143 = sphi 0, %s127
    $region4: #{tpu_custom_call.1} parent=1 // loop_header_branch
      %22 = sbr.rel (%p20) target = $region8
    $region5: #{tpu_custom_call.1} parent=1 // loop_body
      %s24 = ssub.s32 %s19, 1
      %s25 = ssub.s32 %s19, 2
      %s26 = sadd.s32 %s19, 1
      %s27 = ssub.s32 %s19, %s26
      %p28 = scmp.eq.s32.totalorder %s27, 0
      %s30 = sadd.s32 %s29, 1
      %s31 = scalar_select %p28, %s29, %s30
      %p34 = pneg %p28
      %p35 = scmp.eq.s32.totalorder %s19, 1
      %p36 = por %p34, %p35
      %p37 = scmp.ne.s32.totalorder %s29, %s32
      %p38 = scmp.eq.s32.totalorder %s19, 0
      %p39 = por %p37, %p38
      %p40 = scmp.ne.s32.totalorder %s29, %s32
      %p41 = scmp.eq.s32.totalorder %s24, 1
      %p42 = por %p40, %p41
      %p43 = scmp.ne.s32.totalorder %s32, %s33
      %p44 = scmp.eq.s32.totalorder %s24, 0
      %p45 = por %p43, %p44
      %p46 = scmp.ne.s32.totalorder %s32, %s33
      %p47 = scmp.eq.s32.totalorder %s25, 1
      %p48 = por %p46, %p47
      %p50 = scmp.ne.s32.totalorder %s33, %s49
      %p51 = scmp.eq.s32.totalorder %s25, 0
      %p52 = por %p50, %p51
      %s53 = ssub.s32 %s19, %s26
      %p54 = scmp.eq.s32.totalorder %s53, 0
      %s56 = sadd.s32 %s55, 1
      %s57 = scalar_select %p54, %s55, %s56
      %p60 = pneg %p54
      %p61 = scmp.eq.s32.totalorder %s19, 1
      %p62 = por %p60, %p61
      %p63 = scmp.ne.s32.totalorder %s55, %s58
      %p64 = scmp.eq.s32.totalorder %s19, 0
      %p65 = por %p63, %p64
      %p66 = scmp.ne.s32.totalorder %s55, %s58
      %p67 = scmp.eq.s32.totalorder %s24, 1
      %p68 = por %p66, %p67
      %p69 = scmp.ne.s32.totalorder %s58, %s59
      %p70 = scmp.eq.s32.totalorder %s24, 0
      %p71 = por %p69, %p70
      %p72 = scmp.ne.s32.totalorder %s58, %s59
      %p73 = scmp.eq.s32.totalorder %s25, 1
      %p74 = por %p72, %p73
      %p76 = scmp.ne.s32.totalorder %s59, %s75
      %p77 = scmp.eq.s32.totalorder %s25, 0
      %p78 = por %p76, %p77
      %s80 = sadd.s32 %s79, 1
      %p83 = scmp.eq.s32.totalorder %s19, 1
      %p84 = scmp.ne.s32.totalorder %s79, %s81
      %p85 = scmp.eq.s32.totalorder %s19, 0
      %p86 = por %p84, %p85
      %p87 = scmp.ne.s32.totalorder %s79, %s81
      %p88 = scmp.eq.s32.totalorder %s24, 1
      %p89 = por %p87, %p88
      %p90 = scmp.ne.s32.totalorder %s81, %s82
      %p91 = scmp.eq.s32.totalorder %s24, 0
      %p92 = por %p90, %p91
      %p93 = scmp.ne.s32.totalorder %s81, %s82
      %p94 = scmp.eq.s32.totalorder %s25, 1
      %p95 = por %p93, %p94
      %p97 = scmp.ne.s32.totalorder %s82, %s96
      %p98 = scmp.eq.s32.totalorder %s25, 0
      %p99 = por %p97, %p98
      %s101 = sadd.s32 %s100, 1
      %p104 = scmp.eq.s32.totalorder %s19, 1
      %p105 = scmp.ne.s32.totalorder %s100, %s102
      %p106 = scmp.eq.s32.totalorder %s19, 0
      %p107 = por %p105, %p106
      %p108 = scmp.ne.s32.totalorder %s100, %s102
      %p109 = scmp.eq.s32.totalorder %s24, 1
      %p110 = por %p108, %p109
      %p111 = scmp.ne.s32.totalorder %s102, %s103
      %p112 = scmp.eq.s32.totalorder %s24, 0
      %p113 = por %p111, %p112
      %p114 = scmp.ne.s32.totalorder %s102, %s103
      %p115 = scmp.eq.s32.totalorder %s25, 1
      %p116 = por %p114, %p115
      %p118 = scmp.ne.s32.totalorder %s103, %s117
      %p119 = scmp.eq.s32.totalorder %s25, 0
      %p120 = por %p118, %p119
      %s121 = ssub.s32 %s19, %s26
      %p122 = scmp.eq.s32.totalorder %s121, 0
      %s124 = sadd.s32 %s123, 1
      %s125 = scalar_select %p122, %s123, %s124
      %p128 = pneg %p122
      %p129 = scmp.eq.s32.totalorder %s19, 1
      %p130 = por %p128, %p129
      %p131 = scmp.ne.s32.totalorder %s123, %s126
      %p132 = scmp.eq.s32.totalorder %s19, 0
      %p133 = por %p131, %p132
      %p134 = scmp.ne.s32.totalorder %s123, %s126
      %p135 = scmp.eq.s32.totalorder %s24, 1
      %p136 = por %p134, %p135
      %p137 = scmp.ne.s32.totalorder %s126, %s127
      %p138 = scmp.eq.s32.totalorder %s24, 0
      %p139 = por %p137, %p138
      %p140 = scmp.ne.s32.totalorder %s126, %s127
      %p141 = scmp.eq.s32.totalorder %s25, 1
      %p142 = por %p140, %p141
      %p144 = scmp.ne.s32.totalorder %s127, %s143
      %p145 = scmp.eq.s32.totalorder %s25, 0
      %p146 = por %p144, %p145
      %p147 = scmp.le.s32.totalorder 1, %s19
      %p148 = scmp.lt.s32.totalorder %s19, 3
      %p149 = pnand %p147, %p148
      %p150 = pneg %p149
      // Predicated region
      $region9: #{tpu_custom_call.1} parent=5 // pred_check
        _
      $region10: #{tpu_custom_call.1} parent=5 // pred_check_branch
        %152 = sbr.rel (%p149) target = $region12
      $region11: #{tpu_custom_call.1} parent=5 // pred_region
        %s153 = ssub.s32 %s19, 1
        // Predicated region
        $region13: #{tpu_custom_call.1} parent=11 // pred_check
          %p154 = pneg %p92
        $region14: #{tpu_custom_call.1} parent=11 // pred_check_branch
          %156 = sbr.rel (%p154) target = $region16
        $region15: #{tpu_custom_call.1} parent=11 // pred_region
          %s158 = ssub.s32 512, 512
          %159 = vsyncadd [#allocation6], %s158
          %s160 = sshll.u32 [#allocation7], 4
          %s161 = int_to_ptr.vmem [resolvable:$true] %s160
          %166 = dma.hbm_to_vmem [thread:$0]  %s2, 512, %s161, [#allocation6], 64, 64, 4
        $region16: #{tpu_custom_call.1} parent=11 // pred_fallthru
          _
        // Predicated region
        $region17: #{tpu_custom_call.1} parent=11 // pred_check
          %p167 = pneg %p113
        $region18: #{tpu_custom_call.1} parent=11 // pred_check_branch
          %169 = sbr.rel (%p167) target = $region20
        $region19: #{tpu_custom_call.1} parent=11 // pred_region
          _
        $region20: #{tpu_custom_call.1} parent=11 // pred_fallthru
          _
      $region12: #{tpu_custom_call.1} parent=5 // pred_fallthru
        _
      %p170 = scmp.lt.s32.totalorder %s19, 2
      // Predicated region
      $region21: #{tpu_custom_call.1} parent=5 // pred_check
        %p171 = pneg %p170
      $region22: #{tpu_custom_call.1} parent=5 // pred_check_branch
        %173 = sbr.rel (%p171) target = $region24
      $region23: #{tpu_custom_call.1} parent=5 // pred_region
        // Predicated region
        $region25: #{tpu_custom_call.1} parent=23 // pred_check
          %p174 = pneg %p39
        $region26: #{tpu_custom_call.1} parent=23 // pred_check_branch
          %176 = sbr.rel (%p174) target = $region28
        $region27: #{tpu_custom_call.1} parent=23 // pred_region
          %s177 = sand.u32 %s29, 1
          %s178 = scalar_lea.sflag [#allocation3], %s177
          %s179 = sand.u32 %s29, 1
          %s180 = smul.addr %s179, 8
          %s181 = scalar_lea.vmem [#allocation2], %s180
          %s182 = smul.u32 2, %s19
          %s184 = ssub.s32 128, 128
          %185 = vsyncadd %s178, %s184
          %s186 = smul.addr %s182, 64
          %s187 = scalar_lea.hbm %s0, %s186
          %s188 = sshll.u32 %s181, 4
          %s189 = int_to_ptr.vmem [resolvable:$true] %s188
          %194 = dma.hbm_to_vmem [thread:$0]  %s187, 128, %s189, %s178, 64, 64, 4
        $region28: #{tpu_custom_call.1} parent=23 // pred_fallthru
          _
        // Predicated region
        $region29: #{tpu_custom_call.1} parent=23 // pred_check
          %p195 = pneg %p65
        $region30: #{tpu_custom_call.1} parent=23 // pred_check_branch
          %197 = sbr.rel (%p195) target = $region32
        $region31: #{tpu_custom_call.1} parent=23 // pred_region
          %s198 = sand.u32 %s19, 1
          %s199 = scalar_lea.sflag [#allocation6], %s198
          %s200 = sand.u32 %s55, 1
          %s201 = smul.addr %s200, 8
          %s202 = scalar_lea.vmem [#allocation5], %s201
          %s203 = smul.u32 2, %s19
          %s205 = ssub.s32 128, 128
          %206 = vsyncadd %s199, %s205
          %s207 = smul.addr %s203, 64
          %s208 = scalar_lea.hbm %s1, %s207
          %s209 = sshll.u32 %s202, 4
          %s210 = int_to_ptr.vmem [resolvable:$true] %s209
          %215 = dma.hbm_to_vmem [thread:$0]  %s208, 128, %s210, %s199, 64, 64, 4
        $region32: #{tpu_custom_call.1} parent=23 // pred_fallthru
          _
      $region24: #{tpu_custom_call.1} parent=5 // pred_fallthru
        _
      %p216 = scmp.le.s32.totalorder 1, %s19
      %p217 = scmp.lt.s32.totalorder %s19, 3
      %p218 = pnand %p216, %p217
      %p219 = pneg %p218
      // Predicated region
      $region33: #{tpu_custom_call.1} parent=5 // pred_check
        _
      $region34: #{tpu_custom_call.1} parent=5 // pred_check_branch
        %221 = sbr.rel (%p218) target = $region36
      $region35: #{tpu_custom_call.1} parent=5 // pred_region
        %s222 = ssub.s32 %s19, 1
        %s223 = sand.u32 %s32, 1
        %s224 = scalar_lea.sflag [#allocation3], %s223
        %s225 = sand.u32 %s32, 1
        %s226 = smul.addr %s225, 8
        %s227 = scalar_lea.vmem [#allocation2], %s226
        // Predicated region
        $region37: #{tpu_custom_call.1} parent=35 // pred_check
          %p228 = pneg %p45
        $region38: #{tpu_custom_call.1} parent=35 // pred_check_branch
          %230 = sbr.rel (%p228) target = $region40
        $region39: #{tpu_custom_call.1} parent=35 // pred_region
          %231 = dma.done %s224, 128
        $region40: #{tpu_custom_call.1} parent=35 // pred_fallthru
          _
        %s232 = sand.u32 %s24, 1
        %s233 = scalar_lea.sflag [#allocation6], %s232
        %s234 = sand.u32 %s58, 1
        %s235 = smul.addr %s234, 8
        %s236 = scalar_lea.vmem [#allocation5], %s235
        // Predicated region
        $region41: #{tpu_custom_call.1} parent=35 // pred_check
          %p237 = pneg %p71
        $region42: #{tpu_custom_call.1} parent=35 // pred_check_branch
          %239 = sbr.rel (%p237) target = $region44
        $region43: #{tpu_custom_call.1} parent=35 // pred_region
          %240 = dma.done %s233, 128
        $region44: #{tpu_custom_call.1} parent=35 // pred_fallthru
          _
        // Predicated region
        $region45: #{tpu_custom_call.1} parent=35 // pred_check
          %p241 = pneg %p92
        $region46: #{tpu_custom_call.1} parent=35 // pred_check_branch
          %243 = sbr.rel (%p241) target = $region48
        $region47: #{tpu_custom_call.1} parent=35 // pred_region
          %244 = dma.done [#allocation6], 512
        $region48: #{tpu_custom_call.1} parent=35 // pred_fallthru
          _
        %s245 = sand.u32 %s32, 1
        %s246 = scalar_lea.sflag [#allocation3], %s245
        %s247 = sand.u32 %s32, 1
        %s248 = smul.addr %s247, 8
        %s249 = scalar_lea.vmem [#allocation2], %s248
        %p250 = pneg %p45
        %p251 = pneg %p42
        %s252 = sand.u32 %s24, 1
        %s253 = scalar_lea.sflag [#allocation6], %s252
        %s254 = sand.u32 %s58, 1
        %s255 = smul.addr %s254, 8
        %s256 = scalar_lea.vmem [#allocation5], %s255
        %p257 = pneg %p71
        %p258 = pneg %p68
        %p259 = pneg %p92
        %p260 = pneg %p89
        %p261 = pneg %p113
        %p262 = pneg %p110
        %p263 = pneg %p139
        %p264 = pneg %p136
        %s265 = sand.u32 %s126, 1
        %s266 = scalar_lea.sflag [#allocation4], %s265
        %s267 = sand.u32 %s126, 1
        %s268 = smul.addr %s267, 16
        %s269 = scalar_lea.vmem [#allocation8], %s268
        %s270 = smul.u32 2, %s24
        %s271 = smul.u32 2, %s24
        %s272 = smul.u32 2, %s24
        %v274 = vld [vmem:[%s227] sm:$0xf]
        %v275 = vld [vmem:[%s227 + $0x4] sm:$0xf]
        %v276 = vld [vmem:[%s236] sm:$0xf]
        %v277 = vld [vmem:[%s236 + $0x4] sm:$0xf]
        %v278 = vld [vmem:[#allocation7] sm:$0xf]
        %v279 = vld [vmem:[#allocation7 + $0x4] sm:$0xf]
        %v280 = vld [vmem:[#allocation7 + $0x8] sm:$0xf]
        %v281 = vld [vmem:[#allocation7 + $0xc] sm:$0xf]
        %v284 = vunpack.c.l.b16 %v276
        %v285 = vunpack.c.l.b16 %v277
        %v286 = vpack.c.b16 %v285, %v284
        %v291 = vunpack.c.l.b16 %v278
        %v292 = vunpack.c.l.b16 %v279
        %v293 = vunpack.c.l.b16 %v280
        %v294 = vunpack.c.l.b16 %v281
        %v295 = vpack.c.b16 %v292, %v291
        %v296 = vpack.c.b16 %v294, %v293
        %vm299 = vcmask 261120
        %v301 = vsel %vm299, %v286, 0
        %303 = vmatprep.subr.bf16.mxu0 0
        %304 = vmatpush1.bf16.msra.mxu0 %v295
        %305 = vmatprep.subr.bf16.mxu0 0
        %306 = vmatpush1.bf16.msra.mxu0 %v296
        %307 = vmatprep.subr.bf16.mxu0 0
        %308 = vmatpush1.bf16.msra.mxu0 0
        %309 = vmatprep.subr.bf16.mxu0 0
        %310 = vmatpush1.bf16.msra.mxu0 0
        %311 = vmatprep.subr.bf16.mxu0 0
        %312 = vmatpush1.bf16.msra.mxu0 0
        %313 = vmatprep.subr.bf16.mxu0 0
        %314 = vmatpush1.bf16.msra.mxu0 0
        %315 = vmatprep.subr.bf16.mxu0 0
        %316 = vmatpush1.bf16.msra.mxu0 0
        %317 = vmatprep.subr.bf16.mxu0 0
        %318 = vmatpush1.bf16.msra.mxu0 0
        %319 = vmatprep.subr.bf16.mxu0 0
        %320 = vmatpush1.bf16.msra.mxu0 0
        %321 = vmatprep.subr.bf16.mxu0 0
        %322 = vmatpush1.bf16.msra.mxu0 0
        %323 = vmatprep.subr.bf16.mxu0 0
        %324 = vmatpush1.bf16.msra.mxu0 0
        %325 = vmatprep.subr.bf16.mxu0 0
        %326 = vmatpush1.bf16.msra.mxu0 0
        %327 = vmatprep.subr.bf16.mxu0 0
        %328 = vmatpush1.bf16.msra.mxu0 0
        %329 = vmatprep.subr.bf16.mxu0 0
        %330 = vmatpush1.bf16.msra.mxu0 0
        %331 = vmatprep.subr.bf16.mxu0 0
        %332 = vmatpush1.bf16.msra.mxu0 0
        %333 = vmatprep.subr.bf16.mxu0 0
        %334 = vmatpush1.bf16.msra.mxu0 0
        %335 = vmatprep.mubr.bf16.mxu0 0
        %336 = vmatmul.mubr.bf16.gmra.mrb[0].mxu0 %v301
        %v337 = vpop.f32.mrb[0].mxu0
        %v338 = vadd.f32 0.0, %v337
        %v339 = vpop.f32.mrb[0].mxu0
        %v340 = vpop.f32.mrb[0].mxu0
        %v341 = vadd.f32 0.0, %v340
        %v342 = vpop.f32.mrb[0].mxu0
        %343 = vdwg.mxu0
        %v344 = vpack.c.bf16 %v341, %v338
        %v346 = vunpack.c.l.b16 %v344
        %v347 = vunpack.c.h.b16 %v344
        %v348 = vpack.c.b16 %v346, %v346
        %v349 = vpack.c.b16 %v347, %v347
        %vm350 = vcmask 64512
        %v352 = vsel %vm350, %v274, 0
        %vm354 = vcmask 1043456
        %v356 = vsel %vm354, %v348, 0
        %358 = vmatprep.subr.bf16.mxu0 0
        %359 = vmatpush1.bf16.msra.mxu0 %v356
        %360 = vmatprep.subr.bf16.mxu0 0
        %361 = vmatpush1.bf16.msra.mxu0 0
        %362 = vmatprep.subr.bf16.mxu0 0
        %363 = vmatpush1.bf16.msra.mxu0 0
        %364 = vmatprep.subr.bf16.mxu0 0
        %365 = vmatpush1.bf16.msra.mxu0 0
        %366 = vmatprep.subr.bf16.mxu0 0
        %367 = vmatpush1.bf16.msra.mxu0 0
        %368 = vmatprep.subr.bf16.mxu0 0
        %369 = vmatpush1.bf16.msra.mxu0 0
        %370 = vmatprep.subr.bf16.mxu0 0
        %371 = vmatpush1.bf16.msra.mxu0 0
        %372 = vmatprep.subr.bf16.mxu0 0
        %373 = vmatpush1.bf16.msra.mxu0 0
        %374 = vmatprep.subr.bf16.mxu0 0
        %375 = vmatpush1.bf16.msra.mxu0 0
        %376 = vmatprep.subr.bf16.mxu0 0
        %377 = vmatpush1.bf16.msra.mxu0 0
        %378 = vmatprep.subr.bf16.mxu0 0
        %379 = vmatpush1.bf16.msra.mxu0 0
        %380 = vmatprep.subr.bf16.mxu0 0
        %381 = vmatpush1.bf16.msra.mxu0 0
        %382 = vmatprep.subr.bf16.mxu0 0
        %383 = vmatpush1.bf16.msra.mxu0 0
        %384 = vmatprep.subr.bf16.mxu0 0
        %385 = vmatpush1.bf16.msra.mxu0 0
        %386 = vmatprep.subr.bf16.mxu0 0
        %387 = vmatpush1.bf16.msra.mxu0 0
        %388 = vmatprep.subr.bf16.mxu0 0
        %389 = vmatpush1.bf16.msra.mxu0 0
        %390 = vmatprep.mubr.bf16.mxu0 0
        %391 = vmatmul.mubr.bf16.gmra.mrb[0].mxu0 %v352
        %v392 = vpop.f32.mrb[0].mxu0
        %v393 = vadd.f32 0.0, %v392
        %v394 = vpop.f32.mrb[0].mxu0
        %v395 = vpop.f32.mrb[0].mxu0
        %v396 = vpop.f32.mrb[0].mxu0
        %397 = vdwg.mxu0
        %v399 = vsel %vm350, %v275, 0
        %v402 = vsel %vm354, %v349, 0
        %404 = vmatprep.subr.bf16.mxu0 0
        %405 = vmatpush1.bf16.msra.mxu0 %v402
        %406 = vmatprep.subr.bf16.mxu0 0
        %407 = vmatpush1.bf16.msra.mxu0 0
        %408 = vmatprep.subr.bf16.mxu0 0
        %409 = vmatpush1.bf16.msra.mxu0 0
        %410 = vmatprep.subr.bf16.mxu0 0
        %411 = vmatpush1.bf16.msra.mxu0 0
        %412 = vmatprep.subr.bf16.mxu0 0
        %413 = vmatpush1.bf16.msra.mxu0 0
        %414 = vmatprep.subr.bf16.mxu0 0
        %415 = vmatpush1.bf16.msra.mxu0 0
        %416 = vmatprep.subr.bf16.mxu0 0
        %417 = vmatpush1.bf16.msra.mxu0 0
        %418 = vmatprep.subr.bf16.mxu0 0
        %419 = vmatpush1.bf16.msra.mxu0 0
        %420 = vmatprep.subr.bf16.mxu0 0
        %421 = vmatpush1.bf16.msra.mxu0 0
        %422 = vmatprep.subr.bf16.mxu0 0
        %423 = vmatpush1.bf16.msra.mxu0 0
        %424 = vmatprep.subr.bf16.mxu0 0
        %425 = vmatpush1.bf16.msra.mxu0 0
        %426 = vmatprep.subr.bf16.mxu0 0
        %427 = vmatpush1.bf16.msra.mxu0 0
        %428 = vmatprep.subr.bf16.mxu0 0
        %429 = vmatpush1.bf16.msra.mxu0 0
        %430 = vmatprep.subr.bf16.mxu0 0
        %431 = vmatpush1.bf16.msra.mxu0 0
        %432 = vmatprep.subr.bf16.mxu0 0
        %433 = vmatpush1.bf16.msra.mxu0 0
        %434 = vmatprep.subr.bf16.mxu0 0
        %435 = vmatpush1.bf16.msra.mxu0 0
        %436 = vmatprep.mubr.bf16.mxu0 0
        %437 = vmatmul.mubr.bf16.gmra.mrb[0].mxu0 %v399
        %v438 = vpop.f32.mrb[0].mxu0
        %v439 = vadd.f32 0.0, %v438
        %v440 = vpop.f32.mrb[0].mxu0
        %v441 = vpop.f32.mrb[0].mxu0
        %v442 = vpop.f32.mrb[0].mxu0
        %443 = vdwg.mxu0
        %v444 = vld [vmem:[%s3] sm:$0x1]
        %v445 = vld [vmem:[%s3 + $0x1] sm:$0x1]
        %v446 = vlaneseq
        %v447 = vshrl.u32 %v446, 7
        %v448 = vsub.s32 0, %v447
        %v449 = vrot.slane %v444, %v448
        %v450 = vadd.f32 %v393, %v449
        %v451 = vadd.f32 %v439, %v449
        %v452 = vmax.f32 %v450, 0.0
        %v453 = vmax.f32 %v451, 0.0
        %v454 = vlaneseq
        %v455 = vshrl.u32 %v454, 7
        %v456 = vsub.s32 0, %v455
        %v457 = vrot.slane %v445, %v456
        %459 = vrot.lane.b32.xlu0 %v457, 16
        %v460 = vpop.permute.xlu0 %459
        %v462 = vadd.f32 %v338, %v460
        %v463 = vadd.f32 %v341, %v460
        %v464 = vmax.f32 %v462, 0.0
        %v465 = vmax.f32 %v463, 0.0
        %468 = vrot.lane.b32.xlu0 %v464, 112
        %v469 = vpop.permute.xlu0 %468
        %470 = vrot.lane.b32.xlu0 %v465, 112
        %v471 = vpop.permute.xlu0 %470
        %v474 = vadd.f32 %v452, %v469
        %v475 = vadd.f32 %v453, %v471
        %v476 = vld [vmem:[%s3 + $0x2] sm:$0x1]
        %v477 = vlaneseq
        %v478 = vshrl.u32 %v477, 7
        %v479 = vsub.s32 0, %v478
        %v480 = vrot.slane %v476, %v479
        %v481 = vmul.f32 %v474, %v480
        %v482 = vmul.f32 %v475, %v480
        %v483 = vld [vmem:[%s3 + $0x3] sm:$0x1]
        %v484 = vlaneseq
        %v485 = vshrl.u32 %v484, 7
        %v486 = vsub.s32 0, %v485
        %v487 = vrot.slane %v483, %v486
        %v488 = vadd.f32 %v481, %v487
        %v489 = vadd.f32 %v482, %v487
        %v490 = vpack.c.bf16 %v489, %v488
        %v491 = vld [vmem:[#allocation7 + $0x10] sm:$0xf]
        %v492 = vld [vmem:[#allocation7 + $0x14] sm:$0xf]
        %v495 = vunpack.c.l.b16 %v491
        %v496 = vunpack.c.l.b16 %v492
        %v497 = vpack.c.b16 %v496, %v495
        %vm499 = vcmask 130048
        %v501 = vsel %vm499, %v490, 0
        %503 = vmatprep.subr.bf16.mxu0 0
        %504 = vmatpush1.bf16.msra.mxu0 %v497
        %505 = vmatprep.subr.bf16.mxu0 0
        %506 = vmatpush1.bf16.msra.mxu0 0
        %507 = vmatprep.subr.bf16.mxu0 0
        %508 = vmatpush1.bf16.msra.mxu0 0
        %509 = vmatprep.subr.bf16.mxu0 0
        %510 = vmatpush1.bf16.msra.mxu0 0
        %511 = vmatprep.subr.bf16.mxu0 0
        %512 = vmatpush1.bf16.msra.mxu0 0
        %513 = vmatprep.subr.bf16.mxu0 0
        %514 = vmatpush1.bf16.msra.mxu0 0
        %515 = vmatprep.subr.bf16.mxu0 0
        %516 = vmatpush1.bf16.msra.mxu0 0
        %517 = vmatprep.subr.bf16.mxu0 0
        %518 = vmatpush1.bf16.msra.mxu0 0
        %519 = vmatprep.subr.bf16.mxu0 0
        %520 = vmatpush1.bf16.msra.mxu0 0
        %521 = vmatprep.subr.bf16.mxu0 0
        %522 = vmatpush1.bf16.msra.mxu0 0
        %523 = vmatprep.subr.bf16.mxu0 0
        %524 = vmatpush1.bf16.msra.mxu0 0
        %525 = vmatprep.subr.bf16.mxu0 0
        %526 = vmatpush1.bf16.msra.mxu0 0
        %527 = vmatprep.subr.bf16.mxu0 0
        %528 = vmatpush1.bf16.msra.mxu0 0
        %529 = vmatprep.subr.bf16.mxu0 0
        %530 = vmatpush1.bf16.msra.mxu0 0
        %531 = vmatprep.subr.bf16.mxu0 0
        %532 = vmatpush1.bf16.msra.mxu0 0
        %533 = vmatprep.subr.bf16.mxu0 0
        %534 = vmatpush1.bf16.msra.mxu0 0
        %535 = vmatprep.mubr.bf16.mxu0 0
        %536 = vmatmul.mubr.bf16.gmra.mrb[0].mxu0 %v501
        %v537 = vpop.f32.mrb[0].mxu0
        %v538 = vadd.f32 0.0, %v537
        %v539 = vpop.f32.mrb[0].mxu0
        %v540 = vpop.f32.mrb[0].mxu0
        %v541 = vadd.f32 0.0, %v540
        %v542 = vpop.f32.mrb[0].mxu0
        %543 = vdwg.mxu0
        %v544 = vpack.c.bf16 %v541, %v538
        %v546 = vunpack.c.l.b16 %v544
        %v547 = vunpack.c.h.b16 %v544
        %v548 = vpack.c.b16 %v546, %v546
        %v549 = vpack.c.b16 %v547, %v547
        %v551 = vsel %vm354, %v548, 0
        %553 = vmatprep.subr.bf16.mxu0 0
        %554 = vmatpush1.bf16.msra.mxu0 %v551
        %555 = vmatprep.subr.bf16.mxu0 0
        %556 = vmatpush1.bf16.msra.mxu0 0
        %557 = vmatprep.subr.bf16.mxu0 0
        %558 = vmatpush1.bf16.msra.mxu0 0
        %559 = vmatprep.subr.bf16.mxu0 0
        %560 = vmatpush1.bf16.msra.mxu0 0
        %561 = vmatprep.subr.bf16.mxu0 0
        %562 = vmatpush1.bf16.msra.mxu0 0
        %563 = vmatprep.subr.bf16.mxu0 0
        %564 = vmatpush1.bf16.msra.mxu0 0
        %565 = vmatprep.subr.bf16.mxu0 0
        %566 = vmatpush1.bf16.msra.mxu0 0
        %567 = vmatprep.subr.bf16.mxu0 0
        %568 = vmatpush1.bf16.msra.mxu0 0
        %569 = vmatprep.subr.bf16.mxu0 0
        %570 = vmatpush1.bf16.msra.mxu0 0
        %571 = vmatprep.subr.bf16.mxu0 0
        %572 = vmatpush1.bf16.msra.mxu0 0
        %573 = vmatprep.subr.bf16.mxu0 0
        %574 = vmatpush1.bf16.msra.mxu0 0
        %575 = vmatprep.subr.bf16.mxu0 0
        %576 = vmatpush1.bf16.msra.mxu0 0
        %577 = vmatprep.subr.bf16.mxu0 0
        %578 = vmatpush1.bf16.msra.mxu0 0
        %579 = vmatprep.subr.bf16.mxu0 0
        %580 = vmatpush1.bf16.msra.mxu0 0
        %581 = vmatprep.subr.bf16.mxu0 0
        %582 = vmatpush1.bf16.msra.mxu0 0
        %583 = vmatprep.subr.bf16.mxu0 0
        %584 = vmatpush1.bf16.msra.mxu0 0
        %585 = vmatprep.mubr.bf16.mxu0 0
        %586 = vmatmul.mubr.bf16.gmra.mrb[0].mxu0 %v352
        %v587 = vpop.f32.mrb[0].mxu0
        %v588 = vadd.f32 0.0, %v587
        %v589 = vpop.f32.mrb[0].mxu0
        %v590 = vpop.f32.mrb[0].mxu0
        %v591 = vpop.f32.mrb[0].mxu0
        %592 = vdwg.mxu0
        %v594 = vsel %vm354, %v549, 0
        %596 = vmatprep.subr.bf16.mxu0 0
        %597 = vmatpush1.bf16.msra.mxu0 %v594
        %598 = vmatprep.subr.bf16.mxu0 0
        %599 = vmatpush1.bf16.msra.mxu0 0
        %600 = vmatprep.subr.bf16.mxu0 0
        %601 = vmatpush1.bf16.msra.mxu0 0
        %602 = vmatprep.subr.bf16.mxu0 0
        %603 = vmatpush1.bf16.msra.mxu0 0
        %604 = vmatprep.subr.bf16.mxu0 0
        %605 = vmatpush1.bf16.msra.mxu0 0
        %606 = vmatprep.subr.bf16.mxu0 0
        %607 = vmatpush1.bf16.msra.mxu0 0
        %608 = vmatprep.subr.bf16.mxu0 0
        %609 = vmatpush1.bf16.msra.mxu0 0
        %610 = vmatprep.subr.bf16.mxu0 0
        %611 = vmatpush1.bf16.msra.mxu0 0
        %612 = vmatprep.subr.bf16.mxu0 0
        %613 = vmatpush1.bf16.msra.mxu0 0
        %614 = vmatprep.subr.bf16.mxu0 0
        %615 = vmatpush1.bf16.msra.mxu0 0
        %616 = vmatprep.subr.bf16.mxu0 0
        %617 = vmatpush1.bf16.msra.mxu0 0
        %618 = vmatprep.subr.bf16.mxu0 0
        %619 = vmatpush1.bf16.msra.mxu0 0
        %620 = vmatprep.subr.bf16.mxu0 0
        %621 = vmatpush1.bf16.msra.mxu0 0
        %622 = vmatprep.subr.bf16.mxu0 0
        %623 = vmatpush1.bf16.msra.mxu0 0
        %624 = vmatprep.subr.bf16.mxu0 0
        %625 = vmatpush1.bf16.msra.mxu0 0
        %626 = vmatprep.subr.bf16.mxu0 0
        %627 = vmatpush1.bf16.msra.mxu0 0
        %628 = vmatprep.mubr.bf16.mxu0 0
        %629 = vmatmul.mubr.bf16.gmra.mrb[0].mxu0 %v399
        %v630 = vpop.f32.mrb[0].mxu0
        %v631 = vadd.f32 0.0, %v630
        %v632 = vpop.f32.mrb[0].mxu0
        %v633 = vpop.f32.mrb[0].mxu0
        %v634 = vpop.f32.mrb[0].mxu0
        %635 = vdwg.mxu0
        %v636 = vld [vmem:[%s3 + $0x4] sm:$0x1]
        %v637 = vld [vmem:[%s3 + $0x5] sm:$0x1]
        %v638 = vlaneseq
        %v639 = vshrl.u32 %v638, 7
        %v640 = vsub.s32 0, %v639
        %v641 = vrot.slane %v636, %v640
        %v642 = vadd.f32 %v588, %v641
        %v643 = vadd.f32 %v631, %v641
        %v644 = vmax.f32 %v642, 0.0
        %v645 = vmax.f32 %v643, 0.0
        %v646 = vlaneseq
        %v647 = vshrl.u32 %v646, 7
        %v648 = vsub.s32 0, %v647
        %v649 = vrot.slane %v637, %v648
        %651 = vrot.lane.b32.xlu0 %v649, 16
        %v652 = vpop.permute.xlu0 %651
        %v654 = vadd.f32 %v538, %v652
        %v655 = vadd.f32 %v541, %v652
        %v656 = vmax.f32 %v654, 0.0
        %v657 = vmax.f32 %v655, 0.0
        %660 = vrot.lane.b32.xlu0 %v656, 112
        %v661 = vpop.permute.xlu0 %660
        %662 = vrot.lane.b32.xlu0 %v657, 112
        %v663 = vpop.permute.xlu0 %662
        %v666 = vadd.f32 %v644, %v661
        %v667 = vadd.f32 %v645, %v663
        %v668 = vld [vmem:[#allocation7 + $0x18] sm:$0xf]
        %v669 = vld [vmem:[#allocation7 + $0x1c] sm:$0xf]
        %v670 = vld [vmem:[%s3 + $0x6] sm:$0x1]
        %v671 = vpack.c.bf16 %v667, %v666
        %v672 = vlaneseq
        %v673 = vshrl.u32 %v672, 7
        %v674 = vsub.s32 0, %v673
        %v675 = vrot.slane %v670, %v674
        %v678 = vunpack.c.l.b16 %v668
        %v679 = vunpack.c.l.b16 %v669
        %v680 = vpack.c.b16 %v679, %v678
        %v683 = vsel %vm499, %v671, 0
        %685 = vmatprep.subr.bf16.mxu0 0
        %686 = vmatpush1.bf16.msra.mxu0 %v680
        %687 = vmatprep.subr.bf16.mxu0 0
        %688 = vmatpush1.bf16.msra.mxu0 0
        %689 = vmatprep.subr.bf16.mxu0 0
        %690 = vmatpush1.bf16.msra.mxu0 0
        %691 = vmatprep.subr.bf16.mxu0 0
        %692 = vmatpush1.bf16.msra.mxu0 0
        %693 = vmatprep.subr.bf16.mxu0 0
        %694 = vmatpush1.bf16.msra.mxu0 0
        %695 = vmatprep.subr.bf16.mxu0 0
        %696 = vmatpush1.bf16.msra.mxu0 0
        %697 = vmatprep.subr.bf16.mxu0 0
        %698 = vmatpush1.bf16.msra.mxu0 0
        %699 = vmatprep.subr.bf16.mxu0 0
        %700 = vmatpush1.bf16.msra.mxu0 0
        %701 = vmatprep.subr.bf16.mxu0 0
        %702 = vmatpush1.bf16.msra.mxu0 0
        %703 = vmatprep.subr.bf16.mxu0 0
        %704 = vmatpush1.bf16.msra.mxu0 0
        %705 = vmatprep.subr.bf16.mxu0 0
        %706 = vmatpush1.bf16.msra.mxu0 0
        %707 = vmatprep.subr.bf16.mxu0 0
        %708 = vmatpush1.bf16.msra.mxu0 0
        %709 = vmatprep.subr.bf16.mxu0 0
        %710 = vmatpush1.bf16.msra.mxu0 0
        %711 = vmatprep.subr.bf16.mxu0 0
        %712 = vmatpush1.bf16.msra.mxu0 0
        %713 = vmatprep.subr.bf16.mxu0 0
        %714 = vmatpush1.bf16.msra.mxu0 0
        %715 = vmatprep.subr.bf16.mxu0 0
        %716 = vmatpush1.bf16.msra.mxu0 0
        %717 = vmatprep.mubr.bf16.mxu0 0
        %718 = vmatmul.mubr.bf16.gmra.mrb[0].mxu0 %v683
        %v719 = vpop.f32.mrb[0].mxu0
        %v720 = vadd.f32 %v675, %v719
        %v721 = vpop.f32.mrb[0].mxu0
        %v722 = vpop.f32.mrb[0].mxu0
        %v723 = vadd.f32 %v675, %v722
        %v724 = vpop.f32.mrb[0].mxu0
        %725 = vdwg.mxu0
        %726 = vmax.xlane.f32.xlu0 %v720
        %v727 = vpop.xlane.xlu0 %726
        %728 = vmax.xlane.f32.xlu0 %v723
        %v729 = vpop.xlane.xlu0 %728
        %v730 = vsub.f32 %v720, %v727
        %v731 = vsub.f32 %v723, %v729
        %v732 = vmul.f32 %v730, 1.442695
        %v733 = vpow.pop %v732
        %v734 = vmul.f32 %v731, 1.442695
        %v735 = vpow.pop %v734
        %736 = vadd.xlane.f32.xlu0 %v733
        %v737 = vpop.xlane.xlu0 %736
        %738 = vadd.xlane.f32.xlu0 %v735
        %v739 = vpop.xlane.xlu0 %738
        %v740 = vrcp.pop %v737
        %v741 = vrcp.pop %v739
        %v742 = vmul.f32 %v733, %v740
        %v743 = vmul.f32 %v735, %v741
        %744 = vst [vmem:[%s269] sm:$0xff] %v742
        %745 = vst [vmem:[%s269 + $0x8] sm:$0xff] %v743
        %s746 = sand.u32 %s126, 1
        %s747 = scalar_lea.sflag [#allocation4], %s746
        %s748 = sand.u32 %s126, 1
        %s749 = smul.addr %s748, 16
        %s750 = scalar_lea.vmem [#allocation8], %s749
        // Predicated region
        $region49: #{tpu_custom_call.1} parent=35 // pred_check
          %p751 = pneg %p136
        $region50: #{tpu_custom_call.1} parent=35 // pred_check_branch
          %753 = sbr.rel (%p751) target = $region52
        $region51: #{tpu_custom_call.1} parent=35 // pred_region
          %s754 = smul.u32 2, %s24
          %s756 = ssub.s32 256, 256
          %757 = vsyncadd %s747, %s756
          %s758 = smul.addr %s754, 128
          %s759 = scalar_lea.hbm %s4, %s758
          %s760 = sshll.u32 %s750, 4
          %s761 = int_to_ptr.vmem [resolvable:$true] %s760
          %766 = dma.vmem_to_hbm [thread:$0]  %s761, 256, %s759, %s747, 128, 128, 8
        $region52: #{tpu_custom_call.1} parent=35 // pred_fallthru
          _
      $region36: #{tpu_custom_call.1} parent=5 // pred_fallthru
        _
      %p767 = scmp.le.s32.totalorder 2, %s19
      // Predicated region
      $region53: #{tpu_custom_call.1} parent=5 // pred_check
        %p768 = pneg %p767
      $region54: #{tpu_custom_call.1} parent=5 // pred_check_branch
        %770 = sbr.rel (%p768) target = $region56
      $region55: #{tpu_custom_call.1} parent=5 // pred_region
        %s771 = ssub.s32 %s19, 2
        // Predicated region
        $region57: #{tpu_custom_call.1} parent=55 // pred_check
          %p772 = pneg %p142
        $region58: #{tpu_custom_call.1} parent=55 // pred_check_branch
          %774 = sbr.rel (%p772) target = $region60
        $region59: #{tpu_custom_call.1} parent=55 // pred_region
          %s775 = sand.u32 %s127, 1
          %s776 = scalar_lea.sflag [#allocation4], %s775
          %s777 = sand.u32 %s127, 1
          %s778 = smul.addr %s777, 16
          %s779 = scalar_lea.vmem [#allocation8], %s778
          %780 = dma.done %s776, 256
        $region60: #{tpu_custom_call.1} parent=55 // pred_fallthru
          _
      $region56: #{tpu_custom_call.1} parent=5 // pred_fallthru
        _
    $region6: #{tpu_custom_call.1} parent=1 // loop_footer
      %s23 = sadd.s32 1, %s19
    $region7: #{tpu_custom_call.1} parent=1 // loop_footer_branch
      %18 = sbr.rel target = $region3
    $region8: #{tpu_custom_call.1} parent=1 // loop_exit
      _
    %781 = vsyncpa [#allocation3], 1
    %s782 = scalar_lea.sflag [#allocation3], 1
    %783 = vsyncpa %s782, 1
    %784 = vsyncpa [#allocation6], 1
    %s785 = scalar_lea.sflag [#allocation6], 1
    %786 = vsyncpa %s785, 1
    %787 = vsyncpa [#allocation4], 1
    %s788 = scalar_lea.sflag [#allocation4], 1
    %789 = vsyncpa %s788, 1

</llo_original>
